<compile_context>
chip_gen: v7x
topology: tpu7x:2x2x1
jax: 0.10.0
libtpu: 0.0.40
codegen_flags: <defaults>
</compile_context>

<pallas_src>
import functools

import jax
import jax.numpy as jnp
from jax.experimental import pallas as pl
from jax.experimental.pallas import tpu as pltpu


def _propagation_kernel(x_ref, y_ref, ox_ref, oy_ref, xpad_ref, ypad_ref, *,
                        f, d, H, W, Hout, Wout, TILE_H):
    """grid = (B, f, Hout // TILE_H).

    x_ref / y_ref       : (1, C, H, W)            unpadded inputs, VMEM-resident per batch
    ox_ref / oy_ref     : (1, f, C, TILE_H, Wout)  output tile: channels k = di*f + dj, dj = 0..f-1
    xpad_ref / ypad_ref : (C, H+2d, W+2d)          reflection-padded scratch (built at t == 0)
    """
    di = pl.program_id(1)
    t = pl.program_id(2)

    @pl.when(t == 0)
    def _build_padded():
        # ReflectionPad2d (no edge duplication), done entirely in VMEM.
        for src, dst in ((x_ref, xpad_ref), (y_ref, ypad_ref)):
            # Center region, copied in row chunks to bound live vreg footprint.
            r0 = 0
            while r0 < H:
                rh = min(TILE_H, H - r0)
                dst[:, d + r0:d + r0 + rh, d:d + W] = src[0, :, r0:r0 + rh, :]
                r0 += rh
            # Reflected top/bottom rows (center columns only).
            for i in range(1, d + 1):
                dst[:, d - i:d - i + 1, d:d + W] = src[0, :, i:i + 1, :]
                dst[:, d + H - 1 + i:d + H + i, d:d + W] = src[0, :, H - 1 - i:H - i, :]
            # Reflected left/right columns over the full padded height.
            for j in range(1, d + 1):
                dst[:, :, d - j:d - j + 1] = dst[:, :, d + j:d + j + 1]
                dst[:, :, d + W - 1 + j:d + W + j] = dst[:, :, d + W - 1 - j:d + W - j]

    # Taps: output channel k = di*f + dj reads the padded input shifted by (di*d, dj*d).
    row0 = t * TILE_H + di * d          # dynamic sublane offset
    for dj in range(f):                  # static unroll; dj*d is a static lane offset
        c0 = dj * d
        ox_ref[0, dj] = xpad_ref[:, pl.ds(row0, TILE_H), c0:c0 + Wout]
        oy_ref[0, dj] = ypad_ref[:, pl.ds(row0, TILE_H), c0:c0 + Wout]


def _choose_tile_h(Hout, bytes_per_out_row, budget_bytes):
    """Largest multiple-of-8 divisor of Hout whose output blocks fit the budget."""
    if Hout % 8 != 0:
        return Hout                       # BlockSpec rule: multiple of 8 or full dim
    divisors = [th for th in range(8, Hout + 1, 8) if Hout % th == 0]
    fitting = [th for th in divisors if th * bytes_per_out_row <= budget_bytes]
    return max(fitting) if fitting else min(divisors)


def propagation(inref_x, inref_y, dilation, filter_size=3):
    """JAX/Pallas equivalent of Propagation(filter_size).forward(inref_x, inref_y, dilation)."""
    d = int(dilation)
    f = int(filter_size)
    B, C, H, W = inref_x.shape
    assert inref_y.shape == inref_x.shape
    assert 0 <= d <= H - 1 and d <= W - 1, "ReflectionPad2d requires pad <= dim - 1"

    Hp, Wp = H + 2 * d, W + 2 * d
    # conv3d output spatial size with padding=0, dilation=d, kernel f:
    Hout = Hp - d * (f - 1)
    Wout = Wp - d * (f - 1)

    itemsize = jnp.dtype(inref_x.dtype).itemsize
    # Output bytes per output row across both tensors and both pipeline buffers.
    bytes_per_out_row = 2 * 2 * f * C * Wout * itemsize
    TILE_H = _choose_tile_h(Hout, bytes_per_out_row, budget_bytes=16 * 1024 * 1024)
    T = Hout // TILE_H

    # Per-step VMEM footprint estimate -> explicit scoped-VMEM limit (v7x: 64 MiB physical).
    in_bytes = 2 * 2 * C * H * W * itemsize
    scr_bytes = 2 * C * Hp * Wp * itemsize
    out_bytes = TILE_H * bytes_per_out_row
    est = in_bytes + scr_bytes + out_bytes
    vmem_limit = int(min(64 * 1024 * 1024, max(est + (4 << 20), 32 * 1024 * 1024)))

    kernel = functools.partial(
        _propagation_kernel,
        f=f, d=d, H=H, W=W, Hout=Hout, Wout=Wout, TILE_H=TILE_H,
    )

    # Input block: full per-batch image, same block index across (di, t) -> stays resident.
    in_spec = pl.BlockSpec((1, C, H, W), lambda b, di, t: (b, 0, 0, 0))
    # Output block: f taps (fixed di), one row tile; small => real double-buffered writeback.
    out_spec = pl.BlockSpec((1, f, C, TILE_H, Wout), lambda b, di, t: (b, di, 0, t, 0))

    ox, oy = pl.pallas_call(
        kernel,
        out_shape=(
            jax.ShapeDtypeStruct((B, f * f, C, Hout, Wout), inref_x.dtype),
            jax.ShapeDtypeStruct((B, f * f, C, Hout, Wout), inref_y.dtype),
        ),
        grid_spec=pltpu.PrefetchScalarGridSpec(
            num_scalar_prefetch=0,
            grid=(B, f, T),
            in_specs=[in_spec, in_spec],
            out_specs=[out_spec, out_spec],
            scratch_shapes=[
                pltpu.VMEM((C, Hp, Wp), inref_x.dtype),
                pltpu.VMEM((C, Hp, Wp), inref_y.dtype),
            ],
        ),
        compiler_params=pltpu.CompilerParams(
            dimension_semantics=("parallel", "parallel", "arbitrary"),
            vmem_limit_bytes=vmem_limit,
        ),
    )(inref_x, inref_y)

    aggregated_x = ox.reshape(B, f * f * C, Hout, Wout)
    aggregated_y = oy.reshape(B, f * f * C, Hout, Wout)
    return aggregated_x, aggregated_y


def _reference(inref_x, inref_y, dilation, filter_size=3):
    """Pure-JAX reference reproducing the PyTorch conv3d-with-one-hot-filter semantics."""
    d = int(dilation)
    f = int(filter_size)
    B, C, H, W = inref_x.shape
    Hout = H + 2 * d - d * (f - 1)
    Wout = W + 2 * d - d * (f - 1)

    def one(x):
        xp = jnp.pad(x, ((0, 0), (0, 0), (d, d), (d, d)), mode="reflect")
        taps = []
        for k in range(f * f):
            di, dj = divmod(k, f)
            taps.append(xp[:, :, di * d:di * d + Hout, dj * d:dj * d + Wout])
        out = jnp.stack(taps, axis=1)              # (B, f*f, C, Hout, Wout)
        return out.reshape(B, f * f * C, Hout, Wout)

    return one(inref_x), one(inref_y)


if __name__ == "__main__":
    filter_size = 3   # PatchMatch uses propagation_filter_size = 3

    key = jax.random.PRNGKey(0)
    kx, ky = jax.random.split(key)
    x = jax.random.normal(kx, (2, 4, 16, 16), dtype=jnp.float32)
    y = jax.random.normal(ky, (2, 4, 16, 16), dtype=jnp.float32)

    for dilation in (1, 2, 4):   # PatchMatch sweeps k = 1, 2, 4, ... <= minWH
        agg_x, agg_y = propagation(x, y, dilation, filter_size)
        jax.block_until_ready(agg_x)
        jax.block_until_ready(agg_y)

        ref_x, ref_y = _reference(x, y, dilation, filter_size)
        assert agg_x.shape == ref_x.shape, (agg_x.shape, ref_x.shape)
        assert agg_y.shape == ref_y.shape, (agg_y.shape, ref_y.shape)
        assert jnp.allclose(agg_x, ref_x), f"aggregated_x mismatch vs reference (d={dilation})"
        assert jnp.allclose(agg_y, ref_y), f"aggregated_y mismatch vs reference (d={dilation})"

    print("KERNEL_OK")
</pallas_src>

<mosaic_0001>
module attributes {stable_mosaic.version = 11 : i64} {
  func.func @_propagation_kernel(%arg0: i32, %arg1: i32, %arg2: i32, %arg3: memref<1x4x16x16xf32, #tpu.memory_space<vmem>>, %arg4: memref<1x4x16x16xf32, #tpu.memory_space<vmem>>, %arg5: memref<1x3x4x16x16xf32, #tpu.memory_space<vmem>>, %arg6: memref<1x3x4x16x16xf32, #tpu.memory_space<vmem>>, %arg7: memref<4x18x18xf32, #tpu.memory_space<vmem>>, %arg8: memref<4x18x18xf32, #tpu.memory_space<vmem>>) attributes {dimension_semantics = [#tpu.dimension_semantics<parallel>, #tpu.dimension_semantics<parallel>, #tpu.dimension_semantics<arbitrary>], iteration_bounds = array<i64: 2, 3, 1>, scalar_prefetch = 0 : i64, scratch_operands = 2 : i64, tpu.core_type = #tpu.core_type<tc>, window_params = [{transform_indices = @transform_0, window_bounds = array<i64: 1, 4, 16, 16>}, {transform_indices = @transform_1, window_bounds = array<i64: 1, 4, 16, 16>}, {transform_indices = @transform_2, window_bounds = array<i64: 1, 3, 4, 16, 16>}, {transform_indices = @transform_3, window_bounds = array<i64: 1, 3, 4, 16, 16>}]} {
    %c0_i32 = arith.constant 0 : i32
    %0 = arith.cmpi eq, %arg2, %c0_i32 : i32
    %1 = arith.extui %0 : i1 to i32
    %c0_i32_0 = arith.constant 0 : i32
    %2 = arith.cmpi ne, %1, %c0_i32_0 : i32
    scf.if %2 {
      %c0_40 = arith.constant 0 : index
      %c0_41 = arith.constant 0 : index
      %c0_42 = arith.constant 0 : index
      %c0_43 = arith.constant 0 : index
      %36 = vector.load %arg3[%c0_40, %c0_41, %c0_42, %c0_43] : memref<1x4x16x16xf32, #tpu.memory_space<vmem>>, vector<1x4x16x16xf32>
      %37 = vector.shape_cast %36 : vector<1x4x16x16xf32> to vector<4x16x16xf32>
      %c0_44 = arith.constant 0 : index
      %c1_45 = arith.constant 1 : index
      %c1_46 = arith.constant 1 : index
      %38 = vector.load %arg7[%c0_44, %c1_45, %c1_46] : memref<4x18x18xf32, #tpu.memory_space<vmem>>, vector<4x16x16xf32>
      tpu.vector_store %arg7[%c0_44, %c1_45, %c1_46], %37 {strides = array<i32>} : memref<4x18x18xf32, #tpu.memory_space<vmem>>, vector<4x16x16xf32>,
      %c0_47 = arith.constant 0 : index
      %c0_48 = arith.constant 0 : index
      %c1_49 = arith.constant 1 : index
      %c0_50 = arith.constant 0 : index
      %39 = vector.load %arg3[%c0_47, %c0_48, %c1_49, %c0_50] : memref<1x4x16x16xf32, #tpu.memory_space<vmem>>, vector<1x4x1x16xf32>
      %40 = vector.shape_cast %39 : vector<1x4x1x16xf32> to vector<4x1x16xf32>
      %c0_51 = arith.constant 0 : index
      %c0_52 = arith.constant 0 : index
      %c1_53 = arith.constant 1 : index
      %41 = vector.load %arg7[%c0_51, %c0_52, %c1_53] : memref<4x18x18xf32, #tpu.memory_space<vmem>>, vector<4x1x16xf32>
      tpu.vector_store %arg7[%c0_51, %c0_52, %c1_53], %40 {strides = array<i32>} : memref<4x18x18xf32, #tpu.memory_space<vmem>>, vector<4x1x16xf32>,
      %c0_54 = arith.constant 0 : index
      %c0_55 = arith.constant 0 : index
      %c14 = arith.constant 14 : index
      %c0_56 = arith.constant 0 : index
      %42 = vector.load %arg3[%c0_54, %c0_55, %c14, %c0_56] : memref<1x4x16x16xf32, #tpu.memory_space<vmem>>, vector<1x4x1x16xf32>
      %43 = vector.shape_cast %42 : vector<1x4x1x16xf32> to vector<4x1x16xf32>
      %c0_57 = arith.constant 0 : index
      %c17 = arith.constant 17 : index
      %c1_58 = arith.constant 1 : index
      %44 = vector.load %arg7[%c0_57, %c17, %c1_58] : memref<4x18x18xf32, #tpu.memory_space<vmem>>, vector<4x1x16xf32>
      tpu.vector_store %arg7[%c0_57, %c17, %c1_58], %43 {strides = array<i32>} : memref<4x18x18xf32, #tpu.memory_space<vmem>>, vector<4x1x16xf32>,
      %c0_59 = arith.constant 0 : index
      %c0_60 = arith.constant 0 : index
      %c2_61 = arith.constant 2 : index
      %45 = vector.load %arg7[%c0_59, %c0_60, %c2_61] : memref<4x18x18xf32, #tpu.memory_space<vmem>>, vector<4x18x1xf32>
      %c0_62 = arith.constant 0 : index
      %c0_63 = arith.constant 0 : index
      %c0_64 = arith.constant 0 : index
      %46 = vector.load %arg7[%c0_62, %c0_63, %c0_64] : memref<4x18x18xf32, #tpu.memory_space<vmem>>, vector<4x18x1xf32>
      tpu.vector_store %arg7[%c0_62, %c0_63, %c0_64], %45 {strides = array<i32>} : memref<4x18x18xf32, #tpu.memory_space<vmem>>, vector<4x18x1xf32>,
      %c0_65 = arith.constant 0 : index
      %c0_66 = arith.constant 0 : index
      %c15 = arith.constant 15 : index
      %47 = vector.load %arg7[%c0_65, %c0_66, %c15] : memref<4x18x18xf32, #tpu.memory_space<vmem>>, vector<4x18x1xf32>
      %c0_67 = arith.constant 0 : index
      %c0_68 = arith.constant 0 : index
      %c17_69 = arith.constant 17 : index
      %48 = vector.load %arg7[%c0_67, %c0_68, %c17_69] : memref<4x18x18xf32, #tpu.memory_space<vmem>>, vector<4x18x1xf32>
      tpu.vector_store %arg7[%c0_67, %c0_68, %c17_69], %47 {strides = array<i32>} : memref<4x18x18xf32, #tpu.memory_space<vmem>>, vector<4x18x1xf32>,
      %c0_70 = arith.constant 0 : index
      %c0_71 = arith.constant 0 : index
      %c0_72 = arith.constant 0 : index
      %c0_73 = arith.constant 0 : index
      %49 = vector.load %arg4[%c0_70, %c0_71, %c0_72, %c0_73] : memref<1x4x16x16xf32, #tpu.memory_space<vmem>>, vector<1x4x16x16xf32>
      %50 = vector.shape_cast %49 : vector<1x4x16x16xf32> to vector<4x16x16xf32>
      %c0_74 = arith.constant 0 : index
      %c1_75 = arith.constant 1 : index
      %c1_76 = arith.constant 1 : index
      %51 = vector.load %arg8[%c0_74, %c1_75, %c1_76] : memref<4x18x18xf32, #tpu.memory_space<vmem>>, vector<4x16x16xf32>
      tpu.vector_store %arg8[%c0_74, %c1_75, %c1_76], %50 {strides = array<i32>} : memref<4x18x18xf32, #tpu.memory_space<vmem>>, vector<4x16x16xf32>,
      %c0_77 = arith.constant 0 : index
      %c0_78 = arith.constant 0 : index
      %c1_79 = arith.constant 1 : index
      %c0_80 = arith.constant 0 : index
      %52 = vector.load %arg4[%c0_77, %c0_78, %c1_79, %c0_80] : memref<1x4x16x16xf32, #tpu.memory_space<vmem>>, vector<1x4x1x16xf32>
      %53 = vector.shape_cast %52 : vector<1x4x1x16xf32> to vector<4x1x16xf32>
      %c0_81 = arith.constant 0 : index
      %c0_82 = arith.constant 0 : index
      %c1_83 = arith.constant 1 : index
      %54 = vector.load %arg8[%c0_81, %c0_82, %c1_83] : memref<4x18x18xf32, #tpu.memory_space<vmem>>, vector<4x1x16xf32>
      tpu.vector_store %arg8[%c0_81, %c0_82, %c1_83], %53 {strides = array<i32>} : memref<4x18x18xf32, #tpu.memory_space<vmem>>, vector<4x1x16xf32>,
      %c0_84 = arith.constant 0 : index
      %c0_85 = arith.constant 0 : index
      %c14_86 = arith.constant 14 : index
      %c0_87 = arith.constant 0 : index
      %55 = vector.load %arg4[%c0_84, %c0_85, %c14_86, %c0_87] : memref<1x4x16x16xf32, #tpu.memory_space<vmem>>, vector<1x4x1x16xf32>
      %56 = vector.shape_cast %55 : vector<1x4x1x16xf32> to vector<4x1x16xf32>
      %c0_88 = arith.constant 0 : index
      %c17_89 = arith.constant 17 : index
      %c1_90 = arith.constant 1 : index
      %57 = vector.load %arg8[%c0_88, %c17_89, %c1_90] : memref<4x18x18xf32, #tpu.memory_space<vmem>>, vector<4x1x16xf32>
      tpu.vector_store %arg8[%c0_88, %c17_89, %c1_90], %56 {strides = array<i32>} : memref<4x18x18xf32, #tpu.memory_space<vmem>>, vector<4x1x16xf32>,
      %c0_91 = arith.constant 0 : index
      %c0_92 = arith.constant 0 : index
      %c2_93 = arith.constant 2 : index
      %58 = vector.load %arg8[%c0_91, %c0_92, %c2_93] : memref<4x18x18xf32, #tpu.memory_space<vmem>>, vector<4x18x1xf32>
      %c0_94 = arith.constant 0 : index
      %c0_95 = arith.constant 0 : index
      %c0_96 = arith.constant 0 : index
      %59 = vector.load %arg8[%c0_94, %c0_95, %c0_96] : memref<4x18x18xf32, #tpu.memory_space<vmem>>, vector<4x18x1xf32>
      tpu.vector_store %arg8[%c0_94, %c0_95, %c0_96], %58 {strides = array<i32>} : memref<4x18x18xf32, #tpu.memory_space<vmem>>, vector<4x18x1xf32>,
      %c0_97 = arith.constant 0 : index
      %c0_98 = arith.constant 0 : index
      %c15_99 = arith.constant 15 : index
      %60 = vector.load %arg8[%c0_97, %c0_98, %c15_99] : memref<4x18x18xf32, #tpu.memory_space<vmem>>, vector<4x18x1xf32>
      %c0_100 = arith.constant 0 : index
      %c0_101 = arith.constant 0 : index
      %c17_102 = arith.constant 17 : index
      %61 = vector.load %arg8[%c0_100, %c0_101, %c17_102] : memref<4x18x18xf32, #tpu.memory_space<vmem>>, vector<4x18x1xf32>
      tpu.vector_store %arg8[%c0_100, %c0_101, %c17_102], %60 {strides = array<i32>} : memref<4x18x18xf32, #tpu.memory_space<vmem>>, vector<4x18x1xf32>,
    } else {
    }
    %c16_i32 = arith.constant 16 : i32
    %3 = arith.muli %arg2, %c16_i32 : i32
    %c1_i32 = arith.constant 1 : i32
    %4 = arith.muli %arg1, %c1_i32 : i32
    %5 = arith.addi %3, %4 : i32
    %c0 = arith.constant 0 : index
    %6 = arith.index_cast %5 : i32 to index
    %c0_1 = arith.constant 0 : index
    %7 = vector.load %arg7[%c0, %6, %c0_1] : memref<4x18x18xf32, #tpu.memory_space<vmem>>, vector<4x16x16xf32>
    %c0_2 = arith.constant 0 : index
    %c0_3 = arith.constant 0 : index
    %c0_4 = arith.constant 0 : index
    %c0_5 = arith.constant 0 : index
    %c0_6 = arith.constant 0 : index
    %8 = vector.load %arg5[%c0_2, %c0_3, %c0_4, %c0_5, %c0_6] : memref<1x3x4x16x16xf32, #tpu.memory_space<vmem>>, vector<1x1x4x16x16xf32>
    %9 = vector.shape_cast %8 : vector<1x1x4x16x16xf32> to vector<4x16x16xf32>
    %10 = vector.shape_cast %7 : vector<4x16x16xf32> to vector<1x1x4x16x16xf32>
    tpu.vector_store %arg5[%c0_2, %c0_3, %c0_4, %c0_5, %c0_6], %10 {strides = array<i32>} : memref<1x3x4x16x16xf32, #tpu.memory_space<vmem>>, vector<1x1x4x16x16xf32>,
    %c0_7 = arith.constant 0 : index
    %11 = arith.index_cast %5 : i32 to index
    %c0_8 = arith.constant 0 : index
    %12 = vector.load %arg8[%c0_7, %11, %c0_8] : memref<4x18x18xf32, #tpu.memory_space<vmem>>, vector<4x16x16xf32>
    %c0_9 = arith.constant 0 : index
    %c0_10 = arith.constant 0 : index
    %c0_11 = arith.constant 0 : index
    %c0_12 = arith.constant 0 : index
    %c0_13 = arith.constant 0 : index
    %13 = vector.load %arg6[%c0_9, %c0_10, %c0_11, %c0_12, %c0_13] : memref<1x3x4x16x16xf32, #tpu.memory_space<vmem>>, vector<1x1x4x16x16xf32>
    %14 = vector.shape_cast %13 : vector<1x1x4x16x16xf32> to vector<4x16x16xf32>
    %15 = vector.shape_cast %12 : vector<4x16x16xf32> to vector<1x1x4x16x16xf32>
    tpu.vector_store %arg6[%c0_9, %c0_10, %c0_11, %c0_12, %c0_13], %15 {strides = array<i32>} : memref<1x3x4x16x16xf32, #tpu.memory_space<vmem>>, vector<1x1x4x16x16xf32>,
    %c0_14 = arith.constant 0 : index
    %16 = arith.index_cast %5 : i32 to index
    %c1 = arith.constant 1 : index
    %17 = vector.load %arg7[%c0_14, %16, %c1] : memref<4x18x18xf32, #tpu.memory_space<vmem>>, vector<4x16x16xf32>
    %c0_15 = arith.constant 0 : index
    %c1_16 = arith.constant 1 : index
    %c0_17 = arith.constant 0 : index
    %c0_18 = arith.constant 0 : index
    %c0_19 = arith.constant 0 : index
    %18 = vector.load %arg5[%c0_15, %c1_16, %c0_17, %c0_18, %c0_19] : memref<1x3x4x16x16xf32, #tpu.memory_space<vmem>>, vector<1x1x4x16x16xf32>
    %19 = vector.shape_cast %18 : vector<1x1x4x16x16xf32> to vector<4x16x16xf32>
    %20 = vector.shape_cast %17 : vector<4x16x16xf32> to vector<1x1x4x16x16xf32>
    tpu.vector_store %arg5[%c0_15, %c1_16, %c0_17, %c0_18, %c0_19], %20 {strides = array<i32>} : memref<1x3x4x16x16xf32, #tpu.memory_space<vmem>>, vector<1x1x4x16x16xf32>,
    %c0_20 = arith.constant 0 : index
    %21 = arith.index_cast %5 : i32 to index
    %c1_21 = arith.constant 1 : index
    %22 = vector.load %arg8[%c0_20, %21, %c1_21] : memref<4x18x18xf32, #tpu.memory_space<vmem>>, vector<4x16x16xf32>
    %c0_22 = arith.constant 0 : index
    %c1_23 = arith.constant 1 : index
    %c0_24 = arith.constant 0 : index
    %c0_25 = arith.constant 0 : index
    %c0_26 = arith.constant 0 : index
    %23 = vector.load %arg6[%c0_22, %c1_23, %c0_24, %c0_25, %c0_26] : memref<1x3x4x16x16xf32, #tpu.memory_space<vmem>>, vector<1x1x4x16x16xf32>
    %24 = vector.shape_cast %23 : vector<1x1x4x16x16xf32> to vector<4x16x16xf32>
    %25 = vector.shape_cast %22 : vector<4x16x16xf32> to vector<1x1x4x16x16xf32>
    tpu.vector_store %arg6[%c0_22, %c1_23, %c0_24, %c0_25, %c0_26], %25 {strides = array<i32>} : memref<1x3x4x16x16xf32, #tpu.memory_space<vmem>>, vector<1x1x4x16x16xf32>,
    %c0_27 = arith.constant 0 : index
    %26 = arith.index_cast %5 : i32 to index
    %c2 = arith.constant 2 : index
    %27 = vector.load %arg7[%c0_27, %26, %c2] : memref<4x18x18xf32, #tpu.memory_space<vmem>>, vector<4x16x16xf32>
    %c0_28 = arith.constant 0 : index
    %c2_29 = arith.constant 2 : index
    %c0_30 = arith.constant 0 : index
    %c0_31 = arith.constant 0 : index
    %c0_32 = arith.constant 0 : index
    %28 = vector.load %arg5[%c0_28, %c2_29, %c0_30, %c0_31, %c0_32] : memref<1x3x4x16x16xf32, #tpu.memory_space<vmem>>, vector<1x1x4x16x16xf32>
    %29 = vector.shape_cast %28 : vector<1x1x4x16x16xf32> to vector<4x16x16xf32>
    %30 = vector.shape_cast %27 : vector<4x16x16xf32> to vector<1x1x4x16x16xf32>
    tpu.vector_store %arg5[%c0_28, %c2_29, %c0_30, %c0_31, %c0_32], %30 {strides = array<i32>} : memref<1x3x4x16x16xf32, #tpu.memory_space<vmem>>, vector<1x1x4x16x16xf32>,
    %c0_33 = arith.constant 0 : index
    %31 = arith.index_cast %5 : i32 to index
    %c2_34 = arith.constant 2 : index
    %32 = vector.load %arg8[%c0_33, %31, %c2_34] : memref<4x18x18xf32, #tpu.memory_space<vmem>>, vector<4x16x16xf32>
    %c0_35 = arith.constant 0 : index
    %c2_36 = arith.constant 2 : index
    %c0_37 = arith.constant 0 : index
    %c0_38 = arith.constant 0 : index
    %c0_39 = arith.constant 0 : index
    %33 = vector.load %arg6[%c0_35, %c2_36, %c0_37, %c0_38, %c0_39] : memref<1x3x4x16x16xf32, #tpu.memory_space<vmem>>, vector<1x1x4x16x16xf32>
    %34 = vector.shape_cast %33 : vector<1x1x4x16x16xf32> to vector<4x16x16xf32>
    %35 = vector.shape_cast %32 : vector<4x16x16xf32> to vector<1x1x4x16x16xf32>
    tpu.vector_store %arg6[%c0_35, %c2_36, %c0_37, %c0_38, %c0_39], %35 {strides = array<i32>} : memref<1x3x4x16x16xf32, #tpu.memory_space<vmem>>, vector<1x1x4x16x16xf32>,
    return
  }
  func.func @transform_0(%arg0: i32, %arg1: i32, %arg2: i32) -> (i32, i32, i32, i32) {
    %c0_i32 = arith.constant 0 : i32
    %c0_i32_0 = arith.constant 0 : i32
    %c0_i32_1 = arith.constant 0 : i32
    %c0_i32_2 = arith.constant 0 : i32
    return %arg0, %c0_i32, %c0_i32_0, %c0_i32_1 : i32, i32, i32, i32
  }
  func.func @transform_1(%arg0: i32, %arg1: i32, %arg2: i32) -> (i32, i32, i32, i32) {
    %c0_i32 = arith.constant 0 : i32
    %c0_i32_0 = arith.constant 0 : i32
    %c0_i32_1 = arith.constant 0 : i32
    %c0_i32_2 = arith.constant 0 : i32
    return %arg0, %c0_i32, %c0_i32_0, %c0_i32_1 : i32, i32, i32, i32
  }
  func.func @transform_2(%arg0: i32, %arg1: i32, %arg2: i32) -> (i32, i32, i32, i32, i32) {
    %c0_i32 = arith.constant 0 : i32
    %c0_i32_0 = arith.constant 0 : i32
    %c0_i32_1 = arith.constant 0 : i32
    return %arg0, %arg1, %c0_i32, %arg2, %c0_i32_0 : i32, i32, i32, i32, i32
  }
  func.func @transform_3(%arg0: i32, %arg1: i32, %arg2: i32) -> (i32, i32, i32, i32, i32) {
    %c0_i32 = arith.constant 0 : i32
    %c0_i32_0 = arith.constant 0 : i32
    %c0_i32_1 = arith.constant 0 : i32
    return %arg0, %arg1, %c0_i32, %arg2, %c0_i32_0 : i32, i32, i32, i32, i32
  }
}

</mosaic_0001>

<llo_original>
// kernel: tpu_custom_call.1
$region0: #{tpu_custom_call.1}
  #allocation0 [shape = 'u32[]', space=smem, size = 0x4, offset = 0x4, fixed_abs, tag = 'smem constant byte address 0x4 - core index']
  #allocation1 [shape = 'u32[144,128]{1,0:T(1,128)}', space=vmem, size = 0x12000, scoped, tag = 'internal scratch']
  #allocation2 [shape = 'f32[4,18,18]{2,1,0:T(8,128)}', space=vmem, size = 0xc000, scoped, tag = 'scratch operand']
  #allocation3 [shape = 'f32[4,18,18]{2,1,0:T(8,128)}', space=vmem, size = 0xc000, scoped, tag = 'scratch operand']
  %s0 = inlined_call_operand.hbm [shape: f32[2,4,16,16], index: 0, kind: input, shape index: {}]
  %s1 = inlined_call_operand.hbm [shape: f32[2,4,16,16], index: 1, kind: input, shape index: {}]
  %s2 = inlined_call_operand.hbm [shape: f32[2,9,4,16,16], index: 2, kind: output, shape index: {0}]
  %s3 = inlined_call_operand.hbm [shape: f32[2,9,4,16,16], index: 3, kind: output, shape index: {1}]
  %4 = xla_tuple %s2, %s3
  %s5 = sld [smem:[#allocation0]]
  $region61: #{tpu_custom_call.1} parent=0
    _
  %s7 = ssub.s32 1, %s5
  %s8 = scalar_select 0, %s7, %s5
  $region1: #{tpu_custom_call.1} parent=0
    #allocation4 [shape = 'u8[65536]{0}', space=vmem, size = 0x10000, scoped, tag = 'input window, operand 0']
    #allocation5 [shape = 's32[2]{0}', space=sflag, size = 0x8, scoped, tag = 'scoped memory for tpu_custom_call.1']
    #allocation6 [shape = 's32[2]{0}', space=sflag, size = 0x8, scoped, tag = 'scoped memory for tpu_custom_call.1']
    #allocation7 [shape = 'u8[65536]{0}', space=vmem, size = 0x10000, scoped, tag = 'input window, operand 1']
    #allocation8 [shape = 's32[2]{0}', space=sflag, size = 0x8, scoped, tag = 'scoped memory for tpu_custom_call.1']
    #allocation9 [shape = 'u8[196608]{0}', space=vmem, size = 0x30000, scoped, tag = 'output window, operand 0']
    #allocation10 [shape = 'u8[196608]{0}', space=vmem, size = 0x30000, scoped, tag = 'output window, operand 1']
    #allocation11 [shape = 's32[2]{0}', space=sflag, size = 0x8, scoped, tag = 'scoped memory for tpu_custom_call.1']
    %9 = vsyncpa [#allocation5], 0
    %s10 = scalar_lea.sflag [#allocation5], 1
    %11 = vsyncpa %s10, 0
    %12 = vsyncpa [#allocation8], 0
    %s13 = scalar_lea.sflag [#allocation8], 1
    %14 = vsyncpa %s13, 0
    %15 = vsyncpa [#allocation6], 0
    %s16 = scalar_lea.sflag [#allocation6], 1
    %17 = vsyncpa %s16, 0
    %18 = vsyncpa [#allocation11], 0
    %s19 = scalar_lea.sflag [#allocation11], 1
    %20 = vsyncpa %s19, 0
    loop: start=0, step=1, limit=8
    $region2: #{tpu_custom_call.1} parent=1 // loop_pre_header
      _
    $region3: #{tpu_custom_call.1} parent=1 // loop_header
      %s22 = sphi 0, %s26
      %p23 = scmp.ge.s32.totalorder %s22, 8
      %s29 = sphi 0, %s48
      %s30 = sphi 0, %s44
      %s31 = sphi 0, %s40
      %s32 = sphi 0, %s29
      %s33 = sphi 0, %s30
      %s34 = sphi 0, %s31
      %s35 = sphi 0, %s32
      %s36 = sphi 0, %s33
      %s37 = sphi 0, %s34
      %s51 = sphi 0, %s53
      %s54 = sphi 0, %s51
      %s55 = sphi 0, %s54
      %s71 = sphi 0, %s55
      %s77 = sphi 0, %s79
      %s80 = sphi 0, %s77
      %s81 = sphi 0, %s80
      %s97 = sphi 0, %s81
      %s107 = sphi 0, %s109
      %s110 = sphi 0, %s107
      %s111 = sphi 0, %s110
      %s127 = sphi 0, %s111
      %s137 = sphi 0, %s139
      %s140 = sphi 0, %s137
      %s141 = sphi 0, %s140
      %s157 = sphi 0, %s141
    $region4: #{tpu_custom_call.1} parent=1 // loop_header_branch
      %25 = sbr.rel (%p23) target = $region8
    $region5: #{tpu_custom_call.1} parent=1 // loop_body
      %s27 = ssub.s32 %s22, 1
      %s28 = ssub.s32 %s22, 2
      %s38 = sadd.s32 1, %s31
      %p39 = scmp.ge.s32.totalorder %s38, 1
      %s40 = scalar_select %p39, 0, %s38
      %s41 = sadd.s32 1, %s30
      %s42 = scalar_select %p39, %s41, %s30
      %p43 = scmp.ge.s32.totalorder %s42, 3
      %s44 = scalar_select %p43, 0, %s42
      %s45 = sadd.s32 1, %s29
      %s46 = scalar_select %p43, %s45, %s29
      %p47 = scmp.ge.s32.totalorder %s46, 2
      %s48 = scalar_select %p47, 0, %s46
      %s49 = ssub.s32 %s29, %s48
      %p50 = scmp.eq.s32.totalorder %s49, 0
      %s52 = sadd.s32 %s51, 1
      %s53 = scalar_select %p50, %s51, %s52
      %p56 = pneg %p50
      %p57 = scmp.eq.s32.totalorder %s22, 5
      %p58 = por %p56, %p57
      %p59 = scmp.ne.s32.totalorder %s51, %s54
      %p60 = scmp.eq.s32.totalorder %s22, 0
      %p61 = por %p59, %p60
      %p62 = scmp.ne.s32.totalorder %s51, %s54
      %p63 = scmp.eq.s32.totalorder %s27, 5
      %p64 = por %p62, %p63
      %p65 = scmp.ne.s32.totalorder %s54, %s55
      %p66 = scmp.eq.s32.totalorder %s27, 0
      %p67 = por %p65, %p66
      %p68 = scmp.ne.s32.totalorder %s54, %s55
      %p69 = scmp.eq.s32.totalorder %s28, 5
      %p70 = por %p68, %p69
      %p72 = scmp.ne.s32.totalorder %s55, %s71
      %p73 = scmp.eq.s32.totalorder %s28, 0
      %p74 = por %p72, %p73
      %s75 = ssub.s32 %s29, %s48
      %p76 = scmp.eq.s32.totalorder %s75, 0
      %s78 = sadd.s32 %s77, 1
      %s79 = scalar_select %p76, %s77, %s78
      %p82 = pneg %p76
      %p83 = scmp.eq.s32.totalorder %s22, 5
      %p84 = por %p82, %p83
      %p85 = scmp.ne.s32.totalorder %s77, %s80
      %p86 = scmp.eq.s32.totalorder %s22, 0
      %p87 = por %p85, %p86
      %p88 = scmp.ne.s32.totalorder %s77, %s80
      %p89 = scmp.eq.s32.totalorder %s27, 5
      %p90 = por %p88, %p89
      %p91 = scmp.ne.s32.totalorder %s80, %s81
      %p92 = scmp.eq.s32.totalorder %s27, 0
      %p93 = por %p91, %p92
      %p94 = scmp.ne.s32.totalorder %s80, %s81
      %p95 = scmp.eq.s32.totalorder %s28, 5
      %p96 = por %p94, %p95
      %p98 = scmp.ne.s32.totalorder %s81, %s97
      %p99 = scmp.eq.s32.totalorder %s28, 0
      %p100 = por %p98, %p99
      %s101 = ssub.s32 %s29, %s48
      %s102 = ssub.s32 %s30, %s44
      %s103 = sor.u32 %s101, %s102
      %s104 = ssub.s32 %s31, %s40
      %s105 = sor.u32 %s103, %s104
      %p106 = scmp.eq.s32.totalorder %s105, 0
      %s108 = sadd.s32 %s107, 1
      %s109 = scalar_select %p106, %s107, %s108
      %p112 = pneg %p106
      %p113 = scmp.eq.s32.totalorder %s22, 5
      %p114 = por %p112, %p113
      %p115 = scmp.ne.s32.totalorder %s107, %s110
      %p116 = scmp.eq.s32.totalorder %s22, 0
      %p117 = por %p115, %p116
      %p118 = scmp.ne.s32.totalorder %s107, %s110
      %p119 = scmp.eq.s32.totalorder %s27, 5
      %p120 = por %p118, %p119
      %p121 = scmp.ne.s32.totalorder %s110, %s111
      %p122 = scmp.eq.s32.totalorder %s27, 0
      %p123 = por %p121, %p122
      %p124 = scmp.ne.s32.totalorder %s110, %s111
      %p125 = scmp.eq.s32.totalorder %s28, 5
      %p126 = por %p124, %p125
      %p128 = scmp.ne.s32.totalorder %s111, %s127
      %p129 = scmp.eq.s32.totalorder %s28, 0
      %p130 = por %p128, %p129
      %s131 = ssub.s32 %s29, %s48
      %s132 = ssub.s32 %s30, %s44
      %s133 = sor.u32 %s131, %s132
      %s134 = ssub.s32 %s31, %s40
      %s135 = sor.u32 %s133, %s134
      %p136 = scmp.eq.s32.totalorder %s135, 0
      %s138 = sadd.s32 %s137, 1
      %s139 = scalar_select %p136, %s137, %s138
      %p142 = pneg %p136
      %p143 = scmp.eq.s32.totalorder %s22, 5
      %p144 = por %p142, %p143
      %p145 = scmp.ne.s32.totalorder %s137, %s140
      %p146 = scmp.eq.s32.totalorder %s22, 0
      %p147 = por %p145, %p146
      %p148 = scmp.ne.s32.totalorder %s137, %s140
      %p149 = scmp.eq.s32.totalorder %s27, 5
      %p150 = por %p148, %p149
      %p151 = scmp.ne.s32.totalorder %s140, %s141
      %p152 = scmp.eq.s32.totalorder %s27, 0
      %p153 = por %p151, %p152
      %p154 = scmp.ne.s32.totalorder %s140, %s141
      %p155 = scmp.eq.s32.totalorder %s28, 5
      %p156 = por %p154, %p155
      %p158 = scmp.ne.s32.totalorder %s141, %s157
      %p159 = scmp.eq.s32.totalorder %s28, 0
      %p160 = por %p158, %p159
      %p161 = scmp.le.s32.totalorder 1, %s22
      %p162 = scmp.lt.s32.totalorder %s22, 7
      %p163 = pnand %p161, %p162
      %p164 = pneg %p163
      // Predicated region
      $region9: #{tpu_custom_call.1} parent=5 // pred_check
        _
      $region10: #{tpu_custom_call.1} parent=5 // pred_check_branch
        %166 = sbr.rel (%p163) target = $region12
      $region11: #{tpu_custom_call.1} parent=5 // pred_region
        %s167 = ssub.s32 %s22, 1
      $region12: #{tpu_custom_call.1} parent=5 // pred_fallthru
        _
      %p168 = scmp.lt.s32.totalorder %s22, 6
      // Predicated region
      $region13: #{tpu_custom_call.1} parent=5 // pred_check
        %p169 = pneg %p168
      $region14: #{tpu_custom_call.1} parent=5 // pred_check_branch
        %171 = sbr.rel (%p169) target = $region16
      $region15: #{tpu_custom_call.1} parent=5 // pred_region
        // Predicated region
        $region17: #{tpu_custom_call.1} parent=15 // pred_check
          %p172 = pneg %p61
        $region18: #{tpu_custom_call.1} parent=15 // pred_check_branch
          %174 = sbr.rel (%p172) target = $region20
        $region19: #{tpu_custom_call.1} parent=15 // pred_region
          %s175 = sand.u32 %s51, 1
          %s176 = scalar_lea.sflag [#allocation5], %s175
          %s177 = sand.u32 %s51, 1
          %s178 = smul.addr %s177, 64
          %s179 = scalar_lea.vmem [#allocation4], %s178
          %s181 = ssub.s32 1024, 1024
          %182 = vsyncadd %s176, %s181
          %s183 = smul.addr %s29, 8
          %s184 = smul.addr %s183, 128
          %s185 = scalar_lea.hbm %s0, %s184
          %s186 = sshll.u32 %s179, 4
          %s187 = int_to_ptr.vmem [resolvable:$true] %s186
          %192 = dma.hbm_to_vmem [thread:$0]  %s185, 1024, %s187, %s176, 128, 128, 8
        $region20: #{tpu_custom_call.1} parent=15 // pred_fallthru
          _
        // Predicated region
        $region21: #{tpu_custom_call.1} parent=15 // pred_check
          %p193 = pneg %p87
        $region22: #{tpu_custom_call.1} parent=15 // pred_check_branch
          %195 = sbr.rel (%p193) target = $region24
        $region23: #{tpu_custom_call.1} parent=15 // pred_region
          %s196 = sand.u32 %s77, 1
          %s197 = scalar_lea.sflag [#allocation8], %s196
          %s198 = sand.u32 %s77, 1
          %s199 = smul.addr %s198, 64
          %s200 = scalar_lea.vmem [#allocation7], %s199
          %s202 = ssub.s32 1024, 1024
          %203 = vsyncadd %s197, %s202
          %s204 = smul.addr %s29, 8
          %s205 = smul.addr %s204, 128
          %s206 = scalar_lea.hbm %s1, %s205
          %s207 = sshll.u32 %s200, 4
          %s208 = int_to_ptr.vmem [resolvable:$true] %s207
          %213 = dma.hbm_to_vmem [thread:$0]  %s206, 1024, %s208, %s197, 128, 128, 8
        $region24: #{tpu_custom_call.1} parent=15 // pred_fallthru
          _
      $region16: #{tpu_custom_call.1} parent=5 // pred_fallthru
        _
      %p214 = scmp.le.s32.totalorder 1, %s22
      %p215 = scmp.lt.s32.totalorder %s22, 7
      %p216 = pnand %p214, %p215
      %p217 = pneg %p216
      // Predicated region
      $region25: #{tpu_custom_call.1} parent=5 // pred_check
        _
      $region26: #{tpu_custom_call.1} parent=5 // pred_check_branch
        %219 = sbr.rel (%p216) target = $region28
      $region27: #{tpu_custom_call.1} parent=5 // pred_region
        %s220 = ssub.s32 %s22, 1
        %s221 = sand.u32 %s54, 1
        %s222 = scalar_lea.sflag [#allocation5], %s221
        %s223 = sand.u32 %s54, 1
        %s224 = smul.addr %s223, 64
        %s225 = scalar_lea.vmem [#allocation4], %s224
        // Predicated region
        $region29: #{tpu_custom_call.1} parent=27 // pred_check
          %p226 = pneg %p67
        $region30: #{tpu_custom_call.1} parent=27 // pred_check_branch
          %228 = sbr.rel (%p226) target = $region32
        $region31: #{tpu_custom_call.1} parent=27 // pred_region
          %229 = dma.done %s222, 1024
        $region32: #{tpu_custom_call.1} parent=27 // pred_fallthru
          _
        %s230 = sand.u32 %s80, 1
        %s231 = scalar_lea.sflag [#allocation8], %s230
        %s232 = sand.u32 %s80, 1
        %s233 = smul.addr %s232, 64
        %s234 = scalar_lea.vmem [#allocation7], %s233
        // Predicated region
        $region33: #{tpu_custom_call.1} parent=27 // pred_check
          %p235 = pneg %p93
        $region34: #{tpu_custom_call.1} parent=27 // pred_check_branch
          %237 = sbr.rel (%p235) target = $region36
        $region35: #{tpu_custom_call.1} parent=27 // pred_region
          %238 = dma.done %s231, 1024
        $region36: #{tpu_custom_call.1} parent=27 // pred_fallthru
          _
        %s239 = sand.u32 %s54, 1
        %s240 = scalar_lea.sflag [#allocation5], %s239
        %s241 = sand.u32 %s54, 1
        %s242 = smul.addr %s241, 64
        %s243 = scalar_lea.vmem [#allocation4], %s242
        %p244 = pneg %p67
        %p245 = pneg %p64
        %s246 = sand.u32 %s80, 1
        %s247 = scalar_lea.sflag [#allocation8], %s246
        %s248 = sand.u32 %s80, 1
        %s249 = smul.addr %s248, 64
        %s250 = scalar_lea.vmem [#allocation7], %s249
        %p251 = pneg %p93
        %p252 = pneg %p90
        %p253 = pneg %p123
        %p254 = pneg %p120
        %s255 = sand.u32 %s110, 1
        %s256 = scalar_lea.sflag [#allocation6], %s255
        %s257 = sand.u32 %s110, 1
        %s258 = smul.addr %s257, 192
        %s259 = scalar_lea.vmem [#allocation9], %s258
        %p260 = pneg %p153
        %p261 = pneg %p150
        %s262 = sand.u32 %s140, 1
        %s263 = scalar_lea.sflag [#allocation11], %s262
        %s264 = sand.u32 %s140, 1
        %s265 = smul.addr %s264, 192
        %s266 = scalar_lea.vmem [#allocation10], %s265
        %s267 = smul.u32 3, %s33
        %s268 = smul.u32 2, %s34
        %s269 = smul.u32 3, %s33
        %s270 = smul.u32 2, %s34
        %p271 = scmp.eq.s32.totalorder %s34, 0
        // Predicated region
        $region37: #{tpu_custom_call.1} parent=27 // pred_check
          %p272 = pneg %p271
        $region38: #{tpu_custom_call.1} parent=27 // pred_check_branch
          %274 = sbr.rel (%p272) target = $region40
        $region39: #{tpu_custom_call.1} parent=27 // pred_region
          %v275 = vld [vmem:[%s225] sm:$0xff]
          %v276 = vld [vmem:[%s225 + $0x8] sm:$0xff]
          %v277 = vld [vmem:[%s225 + $0x10] sm:$0xff]
          %v278 = vld [vmem:[%s225 + $0x18] sm:$0xff]
          %v279 = vld [vmem:[%s225 + $0x20] sm:$0xff]
          %v280 = vld [vmem:[%s225 + $0x28] sm:$0xff]
          %v281 = vld [vmem:[%s225 + $0x30] sm:$0xff]
          %v282 = vld [vmem:[%s225 + $0x38] sm:$0xff]
          %291 = vrot.lane.b32.xlu0 %v275, 1
          %v292 = vpop.permute.xlu0 %291
          %293 = vrot.lane.b32.xlu0 %v276, 1
          %v294 = vpop.permute.xlu0 %293
          %295 = vrot.lane.b32.xlu0 %v277, 1
          %v296 = vpop.permute.xlu0 %295
          %297 = vrot.lane.b32.xlu0 %v278, 1
          %v298 = vpop.permute.xlu0 %297
          %299 = vrot.lane.b32.xlu0 %v279, 1
          %v300 = vpop.permute.xlu0 %299
          %301 = vrot.lane.b32.xlu0 %v280, 1
          %v302 = vpop.permute.xlu0 %301
          %303 = vrot.lane.b32.xlu0 %v281, 1
          %v304 = vpop.permute.xlu0 %303
          %305 = vrot.lane.b32.xlu0 %v282, 1
          %v306 = vpop.permute.xlu0 %305
          %vm315 = vcmask 138248
          %316 = vst.msk [vmem:[#allocation2 + $0x1] sm:$0xff] %vm315, %v292
          %317 = vst.msk [vmem:[#allocation2 + $0x9] sm:$0xff] %vm315, %v294
          %318 = vst.msk [vmem:[#allocation2 + $0x19] sm:$0xff] %vm315, %v296
          %319 = vst.msk [vmem:[#allocation2 + $0x21] sm:$0xff] %vm315, %v298
          %320 = vst.msk [vmem:[#allocation2 + $0x31] sm:$0xff] %vm315, %v300
          %321 = vst.msk [vmem:[#allocation2 + $0x39] sm:$0xff] %vm315, %v302
          %322 = vst.msk [vmem:[#allocation2 + $0x49] sm:$0xff] %vm315, %v304
          %323 = vst.msk [vmem:[#allocation2 + $0x51] sm:$0xff] %vm315, %v306
          %v324 = vld [vmem:[%s225 + $0x1] sm:$0x1]
          %v325 = vld [vmem:[%s225 + $0x11] sm:$0x1]
          %v326 = vld [vmem:[%s225 + $0x21] sm:$0x1]
          %v327 = vld [vmem:[%s225 + $0x31] sm:$0x1]
          %332 = vrot.lane.b32.xlu0 %v324, 1
          %v333 = vpop.permute.xlu0 %332
          %334 = vrot.lane.b32.xlu0 %v325, 1
          %v335 = vpop.permute.xlu0 %334
          %336 = vrot.lane.b32.xlu0 %v326, 1
          %v337 = vpop.permute.xlu0 %336
          %338 = vrot.lane.b32.xlu0 %v327, 1
          %v339 = vpop.permute.xlu0 %338
          %vm344 = vcmask 131080
          %345 = vst.msk [vmem:[#allocation2] sm:$0x1] %vm344, %v333
          %346 = vst.msk [vmem:[#allocation2 + $0x18] sm:$0x1] %vm344, %v335
          %347 = vst.msk [vmem:[#allocation2 + $0x30] sm:$0x1] %vm344, %v337
          %348 = vst.msk [vmem:[#allocation2 + $0x48] sm:$0x1] %vm344, %v339
          %v349 = vld [vmem:[%s225 + $0xe] sm:$0x1]
          %v350 = vld [vmem:[%s225 + $0x1e] sm:$0x1]
          %v351 = vld [vmem:[%s225 + $0x2e] sm:$0x1]
          %v352 = vld [vmem:[%s225 + $0x3e] sm:$0x1]
          %357 = vrot.lane.b32.xlu0 %v349, 1
          %v358 = vpop.permute.xlu0 %357
          %359 = vrot.lane.b32.xlu0 %v350, 1
          %v360 = vpop.permute.xlu0 %359
          %361 = vrot.lane.b32.xlu0 %v351, 1
          %v362 = vpop.permute.xlu0 %361
          %363 = vrot.lane.b32.xlu0 %v352, 1
          %v364 = vpop.permute.xlu0 %363
          %369 = vst.msk [vmem:[#allocation2 + $0x11] sm:$0x1] %vm344, %v358
          %370 = vst.msk [vmem:[#allocation2 + $0x29] sm:$0x1] %vm344, %v360
          %371 = vst.msk [vmem:[#allocation2 + $0x41] sm:$0x1] %vm344, %v362
          %372 = vst.msk [vmem:[#allocation2 + $0x59] sm:$0x1] %vm344, %v364
          %v373 = vld [vmem:[#allocation2] sm:$0xff]
          %v374 = vld [vmem:[#allocation2 + $0x8] sm:$0xff]
          %v375 = vld [vmem:[#allocation2 + $0x10] sm:$0x3]
          %v376 = vld [vmem:[#allocation2 + $0x18] sm:$0xff]
          %v377 = vld [vmem:[#allocation2 + $0x20] sm:$0xff]
          %v378 = vld [vmem:[#allocation2 + $0x28] sm:$0x3]
          %v379 = vld [vmem:[#allocation2 + $0x30] sm:$0xff]
          %v380 = vld [vmem:[#allocation2 + $0x38] sm:$0xff]
          %v381 = vld [vmem:[#allocation2 + $0x40] sm:$0x3]
          %v382 = vld [vmem:[#allocation2 + $0x48] sm:$0xff]
          %v383 = vld [vmem:[#allocation2 + $0x50] sm:$0xff]
          %v384 = vld [vmem:[#allocation2 + $0x58] sm:$0x3]
          %397 = vrot.lane.b32.xlu0 %v373, 126
          %v398 = vpop.permute.xlu0 %397
          %399 = vrot.lane.b32.xlu0 %v374, 126
          %v400 = vpop.permute.xlu0 %399
          %401 = vrot.lane.b32.xlu0 %v375, 126
          %v402 = vpop.permute.xlu0 %401
          %403 = vrot.lane.b32.xlu0 %v376, 126
          %v404 = vpop.permute.xlu0 %403
          %405 = vrot.lane.b32.xlu0 %v377, 126
          %v406 = vpop.permute.xlu0 %405
          %407 = vrot.lane.b32.xlu0 %v378, 126
          %v408 = vpop.permute.xlu0 %407
          %409 = vrot.lane.b32.xlu0 %v379, 126
          %v410 = vpop.permute.xlu0 %409
          %411 = vrot.lane.b32.xlu0 %v380, 126
          %v412 = vpop.permute.xlu0 %411
          %413 = vrot.lane.b32.xlu0 %v381, 126
          %v414 = vpop.permute.xlu0 %413
          %415 = vrot.lane.b32.xlu0 %v382, 126
          %v416 = vpop.permute.xlu0 %415
          %417 = vrot.lane.b32.xlu0 %v383, 126
          %v418 = vpop.permute.xlu0 %417
          %419 = vrot.lane.b32.xlu0 %v384, 126
          %v420 = vpop.permute.xlu0 %419
          %vm433 = vcmask 7168
          %434 = vst.msk [vmem:[#allocation2] sm:$0xff] %vm433, %v398
          %435 = vst.msk [vmem:[#allocation2 + $0x8] sm:$0xff] %vm433, %v400
          %vm436 = vcmask 1024
          %437 = vst.msk [vmem:[#allocation2 + $0x10] sm:$0x3] %vm436, %v402
          %438 = vst.msk [vmem:[#allocation2 + $0x18] sm:$0xff] %vm433, %v404
          %439 = vst.msk [vmem:[#allocation2 + $0x20] sm:$0xff] %vm433, %v406
          %440 = vst.msk [vmem:[#allocation2 + $0x28] sm:$0x3] %vm436, %v408
          %441 = vst.msk [vmem:[#allocation2 + $0x30] sm:$0xff] %vm433, %v410
          %442 = vst.msk [vmem:[#allocation2 + $0x38] sm:$0xff] %vm433, %v412
          %443 = vst.msk [vmem:[#allocation2 + $0x40] sm:$0x3] %vm436, %v414
          %444 = vst.msk [vmem:[#allocation2 + $0x48] sm:$0xff] %vm433, %v416
          %445 = vst.msk [vmem:[#allocation2 + $0x50] sm:$0xff] %vm433, %v418
          %446 = vst.msk [vmem:[#allocation2 + $0x58] sm:$0x3] %vm436, %v420
          %v447 = vld [vmem:[#allocation2] sm:$0xff]
          %v448 = vld [vmem:[#allocation2 + $0x8] sm:$0xff]
          %v449 = vld [vmem:[#allocation2 + $0x10] sm:$0x3]
          %v450 = vld [vmem:[#allocation2 + $0x18] sm:$0xff]
          %v451 = vld [vmem:[#allocation2 + $0x20] sm:$0xff]
          %v452 = vld [vmem:[#allocation2 + $0x28] sm:$0x3]
          %v453 = vld [vmem:[#allocation2 + $0x30] sm:$0xff]
          %v454 = vld [vmem:[#allocation2 + $0x38] sm:$0xff]
          %v455 = vld [vmem:[#allocation2 + $0x40] sm:$0x3]
          %v456 = vld [vmem:[#allocation2 + $0x48] sm:$0xff]
          %v457 = vld [vmem:[#allocation2 + $0x50] sm:$0xff]
          %v458 = vld [vmem:[#allocation2 + $0x58] sm:$0x3]
          %471 = vrot.lane.b32.xlu0 %v447, 2
          %v472 = vpop.permute.xlu0 %471
          %473 = vrot.lane.b32.xlu0 %v448, 2
          %v474 = vpop.permute.xlu0 %473
          %475 = vrot.lane.b32.xlu0 %v449, 2
          %v476 = vpop.permute.xlu0 %475
          %477 = vrot.lane.b32.xlu0 %v450, 2
          %v478 = vpop.permute.xlu0 %477
          %479 = vrot.lane.b32.xlu0 %v451, 2
          %v480 = vpop.permute.xlu0 %479
          %481 = vrot.lane.b32.xlu0 %v452, 2
          %v482 = vpop.permute.xlu0 %481
          %483 = vrot.lane.b32.xlu0 %v453, 2
          %v484 = vpop.permute.xlu0 %483
          %485 = vrot.lane.b32.xlu0 %v454, 2
          %v486 = vpop.permute.xlu0 %485
          %487 = vrot.lane.b32.xlu0 %v455, 2
          %v488 = vpop.permute.xlu0 %487
          %489 = vrot.lane.b32.xlu0 %v456, 2
          %v490 = vpop.permute.xlu0 %489
          %491 = vrot.lane.b32.xlu0 %v457, 2
          %v492 = vpop.permute.xlu0 %491
          %493 = vrot.lane.b32.xlu0 %v458, 2
          %v494 = vpop.permute.xlu0 %493
          %vm507 = vcmask 146568
          %508 = vst.msk [vmem:[#allocation2] sm:$0xff] %vm507, %v472
          %509 = vst.msk [vmem:[#allocation2 + $0x8] sm:$0xff] %vm507, %v474
          %vm510 = vcmask 140424
          %511 = vst.msk [vmem:[#allocation2 + $0x10] sm:$0x3] %vm510, %v476
          %512 = vst.msk [vmem:[#allocation2 + $0x18] sm:$0xff] %vm507, %v478
          %513 = vst.msk [vmem:[#allocation2 + $0x20] sm:$0xff] %vm507, %v480
          %514 = vst.msk [vmem:[#allocation2 + $0x28] sm:$0x3] %vm510, %v482
          %515 = vst.msk [vmem:[#allocation2 + $0x30] sm:$0xff] %vm507, %v484
          %516 = vst.msk [vmem:[#allocation2 + $0x38] sm:$0xff] %vm507, %v486
          %517 = vst.msk [vmem:[#allocation2 + $0x40] sm:$0x3] %vm510, %v488
          %518 = vst.msk [vmem:[#allocation2 + $0x48] sm:$0xff] %vm507, %v490
          %519 = vst.msk [vmem:[#allocation2 + $0x50] sm:$0xff] %vm507, %v492
          %520 = vst.msk [vmem:[#allocation2 + $0x58] sm:$0x3] %vm510, %v494
          %v521 = vld [vmem:[%s234] sm:$0xff]
          %v522 = vld [vmem:[%s234 + $0x8] sm:$0xff]
          %v523 = vld [vmem:[%s234 + $0x10] sm:$0xff]
          %v524 = vld [vmem:[%s234 + $0x18] sm:$0xff]
          %v525 = vld [vmem:[%s234 + $0x20] sm:$0xff]
          %v526 = vld [vmem:[%s234 + $0x28] sm:$0xff]
          %v527 = vld [vmem:[%s234 + $0x30] sm:$0xff]
          %v528 = vld [vmem:[%s234 + $0x38] sm:$0xff]
          %537 = vrot.lane.b32.xlu0 %v521, 1
          %v538 = vpop.permute.xlu0 %537
          %539 = vrot.lane.b32.xlu0 %v522, 1
          %v540 = vpop.permute.xlu0 %539
          %541 = vrot.lane.b32.xlu0 %v523, 1
          %v542 = vpop.permute.xlu0 %541
          %543 = vrot.lane.b32.xlu0 %v524, 1
          %v544 = vpop.permute.xlu0 %543
          %545 = vrot.lane.b32.xlu0 %v525, 1
          %v546 = vpop.permute.xlu0 %545
          %547 = vrot.lane.b32.xlu0 %v526, 1
          %v548 = vpop.permute.xlu0 %547
          %549 = vrot.lane.b32.xlu0 %v527, 1
          %v550 = vpop.permute.xlu0 %549
          %551 = vrot.lane.b32.xlu0 %v528, 1
          %v552 = vpop.permute.xlu0 %551
          %561 = vst.msk [vmem:[#allocation3 + $0x1] sm:$0xff] %vm315, %v538
          %562 = vst.msk [vmem:[#allocation3 + $0x9] sm:$0xff] %vm315, %v540
          %563 = vst.msk [vmem:[#allocation3 + $0x19] sm:$0xff] %vm315, %v542
          %564 = vst.msk [vmem:[#allocation3 + $0x21] sm:$0xff] %vm315, %v544
          %565 = vst.msk [vmem:[#allocation3 + $0x31] sm:$0xff] %vm315, %v546
          %566 = vst.msk [vmem:[#allocation3 + $0x39] sm:$0xff] %vm315, %v548
          %567 = vst.msk [vmem:[#allocation3 + $0x49] sm:$0xff] %vm315, %v550
          %568 = vst.msk [vmem:[#allocation3 + $0x51] sm:$0xff] %vm315, %v552
          %v569 = vld [vmem:[%s234 + $0x1] sm:$0x1]
          %v570 = vld [vmem:[%s234 + $0x11] sm:$0x1]
          %v571 = vld [vmem:[%s234 + $0x21] sm:$0x1]
          %v572 = vld [vmem:[%s234 + $0x31] sm:$0x1]
          %577 = vrot.lane.b32.xlu0 %v569, 1
          %v578 = vpop.permute.xlu0 %577
          %579 = vrot.lane.b32.xlu0 %v570, 1
          %v580 = vpop.permute.xlu0 %579
          %581 = vrot.lane.b32.xlu0 %v571, 1
          %v582 = vpop.permute.xlu0 %581
          %583 = vrot.lane.b32.xlu0 %v572, 1
          %v584 = vpop.permute.xlu0 %583
          %589 = vst.msk [vmem:[#allocation3] sm:$0x1] %vm344, %v578
          %590 = vst.msk [vmem:[#allocation3 + $0x18] sm:$0x1] %vm344, %v580
          %591 = vst.msk [vmem:[#allocation3 + $0x30] sm:$0x1] %vm344, %v582
          %592 = vst.msk [vmem:[#allocation3 + $0x48] sm:$0x1] %vm344, %v584
          %v593 = vld [vmem:[%s234 + $0xe] sm:$0x1]
          %v594 = vld [vmem:[%s234 + $0x1e] sm:$0x1]
          %v595 = vld [vmem:[%s234 + $0x2e] sm:$0x1]
          %v596 = vld [vmem:[%s234 + $0x3e] sm:$0x1]
          %601 = vrot.lane.b32.xlu0 %v593, 1
          %v602 = vpop.permute.xlu0 %601
          %603 = vrot.lane.b32.xlu0 %v594, 1
          %v604 = vpop.permute.xlu0 %603
          %605 = vrot.lane.b32.xlu0 %v595, 1
          %v606 = vpop.permute.xlu0 %605
          %607 = vrot.lane.b32.xlu0 %v596, 1
          %v608 = vpop.permute.xlu0 %607
          %613 = vst.msk [vmem:[#allocation3 + $0x11] sm:$0x1] %vm344, %v602
          %614 = vst.msk [vmem:[#allocation3 + $0x29] sm:$0x1] %vm344, %v604
          %615 = vst.msk [vmem:[#allocation3 + $0x41] sm:$0x1] %vm344, %v606
          %616 = vst.msk [vmem:[#allocation3 + $0x59] sm:$0x1] %vm344, %v608
          %v617 = vld [vmem:[#allocation3] sm:$0xff]
          %v618 = vld [vmem:[#allocation3 + $0x8] sm:$0xff]
          %v619 = vld [vmem:[#allocation3 + $0x10] sm:$0x3]
          %v620 = vld [vmem:[#allocation3 + $0x18] sm:$0xff]
          %v621 = vld [vmem:[#allocation3 + $0x20] sm:$0xff]
          %v622 = vld [vmem:[#allocation3 + $0x28] sm:$0x3]
          %v623 = vld [vmem:[#allocation3 + $0x30] sm:$0xff]
          %v624 = vld [vmem:[#allocation3 + $0x38] sm:$0xff]
          %v625 = vld [vmem:[#allocation3 + $0x40] sm:$0x3]
          %v626 = vld [vmem:[#allocation3 + $0x48] sm:$0xff]
          %v627 = vld [vmem:[#allocation3 + $0x50] sm:$0xff]
          %v628 = vld [vmem:[#allocation3 + $0x58] sm:$0x3]
          %641 = vrot.lane.b32.xlu0 %v617, 126
          %v642 = vpop.permute.xlu0 %641
          %643 = vrot.lane.b32.xlu0 %v618, 126
          %v644 = vpop.permute.xlu0 %643
          %645 = vrot.lane.b32.xlu0 %v619, 126
          %v646 = vpop.permute.xlu0 %645
          %647 = vrot.lane.b32.xlu0 %v620, 126
          %v648 = vpop.permute.xlu0 %647
          %649 = vrot.lane.b32.xlu0 %v621, 126
          %v650 = vpop.permute.xlu0 %649
          %651 = vrot.lane.b32.xlu0 %v622, 126
          %v652 = vpop.permute.xlu0 %651
          %653 = vrot.lane.b32.xlu0 %v623, 126
          %v654 = vpop.permute.xlu0 %653
          %655 = vrot.lane.b32.xlu0 %v624, 126
          %v656 = vpop.permute.xlu0 %655
          %657 = vrot.lane.b32.xlu0 %v625, 126
          %v658 = vpop.permute.xlu0 %657
          %659 = vrot.lane.b32.xlu0 %v626, 126
          %v660 = vpop.permute.xlu0 %659
          %661 = vrot.lane.b32.xlu0 %v627, 126
          %v662 = vpop.permute.xlu0 %661
          %663 = vrot.lane.b32.xlu0 %v628, 126
          %v664 = vpop.permute.xlu0 %663
          %677 = vst.msk [vmem:[#allocation3] sm:$0xff] %vm433, %v642
          %678 = vst.msk [vmem:[#allocation3 + $0x8] sm:$0xff] %vm433, %v644
          %679 = vst.msk [vmem:[#allocation3 + $0x10] sm:$0x3] %vm436, %v646
          %680 = vst.msk [vmem:[#allocation3 + $0x18] sm:$0xff] %vm433, %v648
          %681 = vst.msk [vmem:[#allocation3 + $0x20] sm:$0xff] %vm433, %v650
          %682 = vst.msk [vmem:[#allocation3 + $0x28] sm:$0x3] %vm436, %v652
          %683 = vst.msk [vmem:[#allocation3 + $0x30] sm:$0xff] %vm433, %v654
          %684 = vst.msk [vmem:[#allocation3 + $0x38] sm:$0xff] %vm433, %v656
          %685 = vst.msk [vmem:[#allocation3 + $0x40] sm:$0x3] %vm436, %v658
          %686 = vst.msk [vmem:[#allocation3 + $0x48] sm:$0xff] %vm433, %v660
          %687 = vst.msk [vmem:[#allocation3 + $0x50] sm:$0xff] %vm433, %v662
          %688 = vst.msk [vmem:[#allocation3 + $0x58] sm:$0x3] %vm436, %v664
          %v689 = vld [vmem:[#allocation3] sm:$0xff]
          %v690 = vld [vmem:[#allocation3 + $0x8] sm:$0xff]
          %v691 = vld [vmem:[#allocation3 + $0x10] sm:$0x3]
          %v692 = vld [vmem:[#allocation3 + $0x18] sm:$0xff]
          %v693 = vld [vmem:[#allocation3 + $0x20] sm:$0xff]
          %v694 = vld [vmem:[#allocation3 + $0x28] sm:$0x3]
          %v695 = vld [vmem:[#allocation3 + $0x30] sm:$0xff]
          %v696 = vld [vmem:[#allocation3 + $0x38] sm:$0xff]
          %v697 = vld [vmem:[#allocation3 + $0x40] sm:$0x3]
          %v698 = vld [vmem:[#allocation3 + $0x48] sm:$0xff]
          %v699 = vld [vmem:[#allocation3 + $0x50] sm:$0xff]
          %v700 = vld [vmem:[#allocation3 + $0x58] sm:$0x3]
          %713 = vrot.lane.b32.xlu0 %v689, 2
          %v714 = vpop.permute.xlu0 %713
          %715 = vrot.lane.b32.xlu0 %v690, 2
          %v716 = vpop.permute.xlu0 %715
          %717 = vrot.lane.b32.xlu0 %v691, 2
          %v718 = vpop.permute.xlu0 %717
          %719 = vrot.lane.b32.xlu0 %v692, 2
          %v720 = vpop.permute.xlu0 %719
          %721 = vrot.lane.b32.xlu0 %v693, 2
          %v722 = vpop.permute.xlu0 %721
          %723 = vrot.lane.b32.xlu0 %v694, 2
          %v724 = vpop.permute.xlu0 %723
          %725 = vrot.lane.b32.xlu0 %v695, 2
          %v726 = vpop.permute.xlu0 %725
          %727 = vrot.lane.b32.xlu0 %v696, 2
          %v728 = vpop.permute.xlu0 %727
          %729 = vrot.lane.b32.xlu0 %v697, 2
          %v730 = vpop.permute.xlu0 %729
          %731 = vrot.lane.b32.xlu0 %v698, 2
          %v732 = vpop.permute.xlu0 %731
          %733 = vrot.lane.b32.xlu0 %v699, 2
          %v734 = vpop.permute.xlu0 %733
          %735 = vrot.lane.b32.xlu0 %v700, 2
          %v736 = vpop.permute.xlu0 %735
          %749 = vst.msk [vmem:[#allocation3] sm:$0xff] %vm507, %v714
          %750 = vst.msk [vmem:[#allocation3 + $0x8] sm:$0xff] %vm507, %v716
          %751 = vst.msk [vmem:[#allocation3 + $0x10] sm:$0x3] %vm510, %v718
          %752 = vst.msk [vmem:[#allocation3 + $0x18] sm:$0xff] %vm507, %v720
          %753 = vst.msk [vmem:[#allocation3 + $0x20] sm:$0xff] %vm507, %v722
          %754 = vst.msk [vmem:[#allocation3 + $0x28] sm:$0x3] %vm510, %v724
          %755 = vst.msk [vmem:[#allocation3 + $0x30] sm:$0xff] %vm507, %v726
          %756 = vst.msk [vmem:[#allocation3 + $0x38] sm:$0xff] %vm507, %v728
          %757 = vst.msk [vmem:[#allocation3 + $0x40] sm:$0x3] %vm510, %v730
          %758 = vst.msk [vmem:[#allocation3 + $0x48] sm:$0xff] %vm507, %v732
          %759 = vst.msk [vmem:[#allocation3 + $0x50] sm:$0xff] %vm507, %v734
          %760 = vst.msk [vmem:[#allocation3 + $0x58] sm:$0x3] %vm510, %v736
        $region40: #{tpu_custom_call.1} parent=27 // pred_fallthru
          _
        %s761 = smul.u32 %s34, 16
        %s762 = sadd.s32 %s761, %s33
        %s763 = scalar_lea.vmem [#allocation2], %s762
        %v764 = vld [vmem:[%s763] sm:$0xff]
        %v765 = vld [vmem:[%s763 + $0x8] sm:$0xff]
        %v766 = vld [vmem:[%s763 + $0x18] sm:$0xff]
        %v767 = vld [vmem:[%s763 + $0x20] sm:$0xff]
        %v768 = vld [vmem:[%s763 + $0x30] sm:$0xff]
        %v769 = vld [vmem:[%s763 + $0x38] sm:$0xff]
        %v770 = vld [vmem:[%s763 + $0x48] sm:$0xff]
        %v771 = vld [vmem:[%s763 + $0x50] sm:$0xff]
        %vm772 = vcmask 130048
        %773 = vst.msk [vmem:[%s259] sm:$0xff] %vm772, %v764
        %774 = vst.msk [vmem:[%s259 + $0x8] sm:$0xff] %vm772, %v765
        %775 = vst.msk [vmem:[%s259 + $0x10] sm:$0xff] %vm772, %v766
        %776 = vst.msk [vmem:[%s259 + $0x18] sm:$0xff] %vm772, %v767
        %777 = vst.msk [vmem:[%s259 + $0x20] sm:$0xff] %vm772, %v768
        %778 = vst.msk [vmem:[%s259 + $0x28] sm:$0xff] %vm772, %v769
        %779 = vst.msk [vmem:[%s259 + $0x30] sm:$0xff] %vm772, %v770
        %780 = vst.msk [vmem:[%s259 + $0x38] sm:$0xff] %vm772, %v771
        %s781 = scalar_lea.vmem [#allocation3], %s762
        %v782 = vld [vmem:[%s781] sm:$0xff]
        %v783 = vld [vmem:[%s781 + $0x8] sm:$0xff]
        %v784 = vld [vmem:[%s781 + $0x18] sm:$0xff]
        %v785 = vld [vmem:[%s781 + $0x20] sm:$0xff]
        %v786 = vld [vmem:[%s781 + $0x30] sm:$0xff]
        %v787 = vld [vmem:[%s781 + $0x38] sm:$0xff]
        %v788 = vld [vmem:[%s781 + $0x48] sm:$0xff]
        %v789 = vld [vmem:[%s781 + $0x50] sm:$0xff]
        %790 = vst.msk [vmem:[%s266] sm:$0xff] %vm772, %v782
        %791 = vst.msk [vmem:[%s266 + $0x8] sm:$0xff] %vm772, %v783
        %792 = vst.msk [vmem:[%s266 + $0x10] sm:$0xff] %vm772, %v784
        %793 = vst.msk [vmem:[%s266 + $0x18] sm:$0xff] %vm772, %v785
        %794 = vst.msk [vmem:[%s266 + $0x20] sm:$0xff] %vm772, %v786
        %795 = vst.msk [vmem:[%s266 + $0x28] sm:$0xff] %vm772, %v787
        %796 = vst.msk [vmem:[%s266 + $0x30] sm:$0xff] %vm772, %v788
        %797 = vst.msk [vmem:[%s266 + $0x38] sm:$0xff] %vm772, %v789
        %v798 = vld [vmem:[%s763] sm:$0xff]
        %v799 = vld [vmem:[%s763 + $0x8] sm:$0xff]
        %v800 = vld [vmem:[%s763 + $0x18] sm:$0xff]
        %v801 = vld [vmem:[%s763 + $0x20] sm:$0xff]
        %v802 = vld [vmem:[%s763 + $0x30] sm:$0xff]
        %v803 = vld [vmem:[%s763 + $0x38] sm:$0xff]
        %v804 = vld [vmem:[%s763 + $0x48] sm:$0xff]
        %v805 = vld [vmem:[%s763 + $0x50] sm:$0xff]
        %814 = vrot.lane.b32.xlu0 %v798, 127
        %v815 = vpop.permute.xlu0 %814
        %816 = vrot.lane.b32.xlu0 %v799, 127
        %v817 = vpop.permute.xlu0 %816
        %818 = vrot.lane.b32.xlu0 %v800, 127
        %v819 = vpop.permute.xlu0 %818
        %820 = vrot.lane.b32.xlu0 %v801, 127
        %v821 = vpop.permute.xlu0 %820
        %822 = vrot.lane.b32.xlu0 %v802, 127
        %v823 = vpop.permute.xlu0 %822
        %824 = vrot.lane.b32.xlu0 %v803, 127
        %v825 = vpop.permute.xlu0 %824
        %826 = vrot.lane.b32.xlu0 %v804, 127
        %v827 = vpop.permute.xlu0 %826
        %828 = vrot.lane.b32.xlu0 %v805, 127
        %v829 = vpop.permute.xlu0 %828
        %s838 = scalar_lea.vmem %s259, 64 [#allocation9]
        %839 = vst.msk [vmem:[%s838] sm:$0xff] %vm772, %v815
        %840 = vst.msk [vmem:[%s838 + $0x8] sm:$0xff] %vm772, %v817
        %841 = vst.msk [vmem:[%s838 + $0x10] sm:$0xff] %vm772, %v819
        %842 = vst.msk [vmem:[%s838 + $0x18] sm:$0xff] %vm772, %v821
        %843 = vst.msk [vmem:[%s838 + $0x20] sm:$0xff] %vm772, %v823
        %844 = vst.msk [vmem:[%s838 + $0x28] sm:$0xff] %vm772, %v825
        %845 = vst.msk [vmem:[%s838 + $0x30] sm:$0xff] %vm772, %v827
        %846 = vst.msk [vmem:[%s838 + $0x38] sm:$0xff] %vm772, %v829
        %v847 = vld [vmem:[%s781] sm:$0xff]
        %v848 = vld [vmem:[%s781 + $0x8] sm:$0xff]
        %v849 = vld [vmem:[%s781 + $0x18] sm:$0xff]
        %v850 = vld [vmem:[%s781 + $0x20] sm:$0xff]
        %v851 = vld [vmem:[%s781 + $0x30] sm:$0xff]
        %v852 = vld [vmem:[%s781 + $0x38] sm:$0xff]
        %v853 = vld [vmem:[%s781 + $0x48] sm:$0xff]
        %v854 = vld [vmem:[%s781 + $0x50] sm:$0xff]
        %863 = vrot.lane.b32.xlu0 %v847, 127
        %v864 = vpop.permute.xlu0 %863
        %865 = vrot.lane.b32.xlu0 %v848, 127
        %v866 = vpop.permute.xlu0 %865
        %867 = vrot.lane.b32.xlu0 %v849, 127
        %v868 = vpop.permute.xlu0 %867
        %869 = vrot.lane.b32.xlu0 %v850, 127
        %v870 = vpop.permute.xlu0 %869
        %871 = vrot.lane.b32.xlu0 %v851, 127
        %v872 = vpop.permute.xlu0 %871
        %873 = vrot.lane.b32.xlu0 %v852, 127
        %v874 = vpop.permute.xlu0 %873
        %875 = vrot.lane.b32.xlu0 %v853, 127
        %v876 = vpop.permute.xlu0 %875
        %877 = vrot.lane.b32.xlu0 %v854, 127
        %v878 = vpop.permute.xlu0 %877
        %s887 = scalar_lea.vmem %s266, 64 [#allocation10]
        %888 = vst.msk [vmem:[%s887] sm:$0xff] %vm772, %v864
        %889 = vst.msk [vmem:[%s887 + $0x8] sm:$0xff] %vm772, %v866
        %890 = vst.msk [vmem:[%s887 + $0x10] sm:$0xff] %vm772, %v868
        %891 = vst.msk [vmem:[%s887 + $0x18] sm:$0xff] %vm772, %v870
        %892 = vst.msk [vmem:[%s887 + $0x20] sm:$0xff] %vm772, %v872
        %893 = vst.msk [vmem:[%s887 + $0x28] sm:$0xff] %vm772, %v874
        %894 = vst.msk [vmem:[%s887 + $0x30] sm:$0xff] %vm772, %v876
        %895 = vst.msk [vmem:[%s887 + $0x38] sm:$0xff] %vm772, %v878
        %v896 = vld [vmem:[%s763] sm:$0xff]
        %v897 = vld [vmem:[%s763 + $0x8] sm:$0xff]
        %v898 = vld [vmem:[%s763 + $0x18] sm:$0xff]
        %v899 = vld [vmem:[%s763 + $0x20] sm:$0xff]
        %v900 = vld [vmem:[%s763 + $0x30] sm:$0xff]
        %v901 = vld [vmem:[%s763 + $0x38] sm:$0xff]
        %v902 = vld [vmem:[%s763 + $0x48] sm:$0xff]
        %v903 = vld [vmem:[%s763 + $0x50] sm:$0xff]
        %912 = vrot.lane.b32.xlu0 %v896, 126
        %v913 = vpop.permute.xlu0 %912
        %914 = vrot.lane.b32.xlu0 %v897, 126
        %v915 = vpop.permute.xlu0 %914
        %916 = vrot.lane.b32.xlu0 %v898, 126
        %v917 = vpop.permute.xlu0 %916
        %918 = vrot.lane.b32.xlu0 %v899, 126
        %v919 = vpop.permute.xlu0 %918
        %920 = vrot.lane.b32.xlu0 %v900, 126
        %v921 = vpop.permute.xlu0 %920
        %922 = vrot.lane.b32.xlu0 %v901, 126
        %v923 = vpop.permute.xlu0 %922
        %924 = vrot.lane.b32.xlu0 %v902, 126
        %v925 = vpop.permute.xlu0 %924
        %926 = vrot.lane.b32.xlu0 %v903, 126
        %v927 = vpop.permute.xlu0 %926
        %s936 = scalar_lea.vmem %s259, 128 [#allocation9]
        %937 = vst.msk [vmem:[%s936] sm:$0xff] %vm772, %v913
        %938 = vst.msk [vmem:[%s936 + $0x8] sm:$0xff] %vm772, %v915
        %939 = vst.msk [vmem:[%s936 + $0x10] sm:$0xff] %vm772, %v917
        %940 = vst.msk [vmem:[%s936 + $0x18] sm:$0xff] %vm772, %v919
        %941 = vst.msk [vmem:[%s936 + $0x20] sm:$0xff] %vm772, %v921
        %942 = vst.msk [vmem:[%s936 + $0x28] sm:$0xff] %vm772, %v923
        %943 = vst.msk [vmem:[%s936 + $0x30] sm:$0xff] %vm772, %v925
        %944 = vst.msk [vmem:[%s936 + $0x38] sm:$0xff] %vm772, %v927
        %v945 = vld [vmem:[%s781] sm:$0xff]
        %v946 = vld [vmem:[%s781 + $0x8] sm:$0xff]
        %v947 = vld [vmem:[%s781 + $0x18] sm:$0xff]
        %v948 = vld [vmem:[%s781 + $0x20] sm:$0xff]
        %v949 = vld [vmem:[%s781 + $0x30] sm:$0xff]
        %v950 = vld [vmem:[%s781 + $0x38] sm:$0xff]
        %v951 = vld [vmem:[%s781 + $0x48] sm:$0xff]
        %v952 = vld [vmem:[%s781 + $0x50] sm:$0xff]
        %961 = vrot.lane.b32.xlu0 %v945, 126
        %v962 = vpop.permute.xlu0 %961
        %963 = vrot.lane.b32.xlu0 %v946, 126
        %v964 = vpop.permute.xlu0 %963
        %965 = vrot.lane.b32.xlu0 %v947, 126
        %v966 = vpop.permute.xlu0 %965
        %967 = vrot.lane.b32.xlu0 %v948, 126
        %v968 = vpop.permute.xlu0 %967
        %969 = vrot.lane.b32.xlu0 %v949, 126
        %v970 = vpop.permute.xlu0 %969
        %971 = vrot.lane.b32.xlu0 %v950, 126
        %v972 = vpop.permute.xlu0 %971
        %973 = vrot.lane.b32.xlu0 %v951, 126
        %v974 = vpop.permute.xlu0 %973
        %975 = vrot.lane.b32.xlu0 %v952, 126
        %v976 = vpop.permute.xlu0 %975
        %s985 = scalar_lea.vmem %s266, 128 [#allocation10]
        %986 = vst.msk [vmem:[%s985] sm:$0xff] %vm772, %v962
        %987 = vst.msk [vmem:[%s985 + $0x8] sm:$0xff] %vm772, %v964
        %988 = vst.msk [vmem:[%s985 + $0x10] sm:$0xff] %vm772, %v966
        %989 = vst.msk [vmem:[%s985 + $0x18] sm:$0xff] %vm772, %v968
        %990 = vst.msk [vmem:[%s985 + $0x20] sm:$0xff] %vm772, %v970
        %991 = vst.msk [vmem:[%s985 + $0x28] sm:$0xff] %vm772, %v972
        %992 = vst.msk [vmem:[%s985 + $0x30] sm:$0xff] %vm772, %v974
        %993 = vst.msk [vmem:[%s985 + $0x38] sm:$0xff] %vm772, %v976
        %s994 = sand.u32 %s110, 1
        %s995 = scalar_lea.sflag [#allocation6], %s994
        %s996 = sand.u32 %s110, 1
        %s997 = smul.addr %s996, 192
        %s998 = scalar_lea.vmem [#allocation9], %s997
        %s999 = sand.u32 %s140, 1
        %s1000 = scalar_lea.sflag [#allocation11], %s999
        %s1001 = sand.u32 %s140, 1
        %s1002 = smul.addr %s1001, 192
        %s1003 = scalar_lea.vmem [#allocation10], %s1002
        // Predicated region
        $region41: #{tpu_custom_call.1} parent=27 // pred_check
          %p1004 = pneg %p120
        $region42: #{tpu_custom_call.1} parent=27 // pred_check_branch
          %1006 = sbr.rel (%p1004) target = $region44
        $region43: #{tpu_custom_call.1} parent=27 // pred_region
          %s1007 = smul.u32 3, %s33
          %s1008 = smul.u32 2, %s34
          %s1010 = ssub.s32 3072, 3072
          %1011 = vsyncadd %s995, %s1010
          %s1012 = smul.addr %s1007, 8
          %s1013 = sadd.s32 %s1008, %s1012
          %s1014 = smul.addr %s32, 72
          %s1015 = sadd.s32 %s1013, %s1014
          %s1016 = smul.addr %s1015, 128
          %s1017 = scalar_lea.hbm %s2, %s1016
          %s1018 = sshll.u32 %s998, 4
          %s1019 = int_to_ptr.vmem [resolvable:$true] %s1018
          %1024 = dma.vmem_to_hbm [thread:$0]  %s1019, 3072, %s1017, %s995, 128, 128, 8
        $region44: #{tpu_custom_call.1} parent=27 // pred_fallthru
          _
        // Predicated region
        $region45: #{tpu_custom_call.1} parent=27 // pred_check
          %p1025 = pneg %p150
        $region46: #{tpu_custom_call.1} parent=27 // pred_check_branch
          %1027 = sbr.rel (%p1025) target = $region48
        $region47: #{tpu_custom_call.1} parent=27 // pred_region
          %s1028 = smul.u32 3, %s33
          %s1029 = smul.u32 2, %s34
          %s1031 = ssub.s32 3072, 3072
          %1032 = vsyncadd %s1000, %s1031
          %s1033 = smul.addr %s1028, 8
          %s1034 = sadd.s32 %s1029, %s1033
          %s1035 = smul.addr %s32, 72
          %s1036 = sadd.s32 %s1034, %s1035
          %s1037 = smul.addr %s1036, 128
          %s1038 = scalar_lea.hbm %s3, %s1037
          %s1039 = sshll.u32 %s1003, 4
          %s1040 = int_to_ptr.vmem [resolvable:$true] %s1039
          %1045 = dma.vmem_to_hbm [thread:$0]  %s1040, 3072, %s1038, %s1000, 128, 128, 8
        $region48: #{tpu_custom_call.1} parent=27 // pred_fallthru
          _
      $region28: #{tpu_custom_call.1} parent=5 // pred_fallthru
        _
      %p1046 = scmp.le.s32.totalorder 2, %s22
      // Predicated region
      $region49: #{tpu_custom_call.1} parent=5 // pred_check
        %p1047 = pneg %p1046
      $region50: #{tpu_custom_call.1} parent=5 // pred_check_branch
        %1049 = sbr.rel (%p1047) target = $region52
      $region51: #{tpu_custom_call.1} parent=5 // pred_region
        %s1050 = ssub.s32 %s22, 2
        // Predicated region
        $region53: #{tpu_custom_call.1} parent=51 // pred_check
          %p1051 = pneg %p126
        $region54: #{tpu_custom_call.1} parent=51 // pred_check_branch
          %1053 = sbr.rel (%p1051) target = $region56
        $region55: #{tpu_custom_call.1} parent=51 // pred_region
          %s1054 = sand.u32 %s111, 1
          %s1055 = scalar_lea.sflag [#allocation6], %s1054
          %s1056 = sand.u32 %s111, 1
          %s1057 = smul.addr %s1056, 192
          %s1058 = scalar_lea.vmem [#allocation9], %s1057
          %1059 = dma.done %s1055, 3072
        $region56: #{tpu_custom_call.1} parent=51 // pred_fallthru
          _
        // Predicated region
        $region57: #{tpu_custom_call.1} parent=51 // pred_check
          %p1060 = pneg %p156
        $region58: #{tpu_custom_call.1} parent=51 // pred_check_branch
          %1062 = sbr.rel (%p1060) target = $region60
        $region59: #{tpu_custom_call.1} parent=51 // pred_region
          %s1063 = sand.u32 %s141, 1
          %s1064 = scalar_lea.sflag [#allocation11], %s1063
          %s1065 = sand.u32 %s141, 1
          %s1066 = smul.addr %s1065, 192
          %s1067 = scalar_lea.vmem [#allocation10], %s1066
          %1068 = dma.done %s1064, 3072
        $region60: #{tpu_custom_call.1} parent=51 // pred_fallthru
          _
      $region52: #{tpu_custom_call.1} parent=5 // pred_fallthru
        _
    $region6: #{tpu_custom_call.1} parent=1 // loop_footer
      %s26 = sadd.s32 1, %s22
    $region7: #{tpu_custom_call.1} parent=1 // loop_footer_branch
      %21 = sbr.rel target = $region3
    $region8: #{tpu_custom_call.1} parent=1 // loop_exit
      _
    %1069 = vsyncpa [#allocation5], 1
    %s1070 = scalar_lea.sflag [#allocation5], 1
    %1071 = vsyncpa %s1070, 1
    %1072 = vsyncpa [#allocation8], 1
    %s1073 = scalar_lea.sflag [#allocation8], 1
    %1074 = vsyncpa %s1073, 1
    %1075 = vsyncpa [#allocation6], 1
    %s1076 = scalar_lea.sflag [#allocation6], 1
    %1077 = vsyncpa %s1076, 1
    %1078 = vsyncpa [#allocation11], 1
    %s1079 = scalar_lea.sflag [#allocation11], 1
    %1080 = vsyncpa %s1079, 1

</llo_original>
